<compile_context>
chip_gen: v7x
topology: tpu7x:2x2x1
jax: 0.10.0
libtpu: 0.0.40
codegen_flags: <defaults>
</compile_context>

<pallas_src>
import functools

import jax
import jax.numpy as jnp
from jax.experimental import pallas as pl
from jax.experimental.pallas import tpu as pltpu


# ---------------------------------------------------------------------------
# VMEM budget / tile selection
# ---------------------------------------------------------------------------
def _vmem_limit_bytes():
    """~75% of physical VMEM (96 MiB on v5e/v6e, 48 MiB on v7x); safe fallback."""
    cap = None
    try:
        info = pltpu.get_tpu_info()
        for name in ("vmem_capacity_bytes", "vmem_size_bytes", "vmem_bytes"):
            cap = getattr(info, name, None)
            if cap:
                break
    except Exception:
        cap = None
    if not cap:
        cap = 64 << 20  # conservative: v7x per-TensorCore VMEM
    return int(cap) * 3 // 4


def _choose_tiles(N, Cin, Cout, L, itemsize, budget, max_cols=None):
    """Pick (TN, TL) so the double-buffered working set
         2*TN*(Cin+Cout)*TL*itemsize + 2*Cout*Cin*itemsize
       fits `budget`, targeting ~4 MiB x blocks (kernel is HBM-bound; large tiles
       amortize the ~0.35us fixed per-grid-step cost).  TL is a multiple of 128 or
       equals L; TN divides N (a ragged N tile would contaminate the batch stats)."""
    resident = 2 * Cout * Cin * itemsize + 8 * Cout * 4        # W (double-buffered) + vectors
    avail = budget - resident
    per_col = 2 * (Cin + Cout) * itemsize                       # double-buffered x + out column
    cols_cap = max(avail // per_col, 128)
    target_cols = max((4 << 20) // max(Cin * itemsize, 1), 128)  # ~4 MiB x block
    cols = int(min(cols_cap, target_cols))
    if max_cols is not None:
        cols = min(cols, int(max_cols))
    cols = max(cols, 128)

    if L <= cols:
        TL = L
        tn_cap = min(max(cols // max(L, 1), 1), 8, N)            # cap static unroll at 8
        TN = 1
        for d in range(int(tn_cap), 0, -1):
            if N % d == 0:
                TN = d
                break
    else:
        TN = 1
        TL = max((cols // 128) * 128, 128)
    return TN, TL


# ---------------------------------------------------------------------------
# Pass 1: per-channel sufficient statistics of y = W x + b, one partial per
# N-shard (output block index depends only on the N grid axis -> resident
# accumulator across the inner L loop; N axis safely "parallel").
# ---------------------------------------------------------------------------
def _stats_kernel(x_ref, w_ref, b_ref, sum_ref, sq_ref, *, L, TL, n_l, TN):
    l = pl.program_id(1)

    @pl.when(l == 0)
    def _():
        sum_ref[...] = jnp.zeros_like(sum_ref)
        sq_ref[...] = jnp.zeros_like(sq_ref)

    w = w_ref[...]
    b = b_ref[...]
    cout = w.shape[0]

    def accumulate(mask_tail):
        s = jnp.zeros((cout, 1), jnp.float32)
        q = jnp.zeros((cout, 1), jnp.float32)
        for i in range(TN):                       # static unroll, TN <= 8
            y = jnp.dot(w, x_ref[i], preferred_element_type=jnp.float32) + b
            if mask_tail:
                lane = jax.lax.broadcasted_iota(jnp.int32, y.shape, 1)
                y = jnp.where(lane < (L - (n_l - 1) * TL), y, 0.0)
            s = s + jnp.sum(y, axis=-1, keepdims=True)
            q = q + jnp.sum(y * y, axis=-1, keepdims=True)
        sum_ref[0] += s
        sq_ref[0] += q

    if L % TL == 0:
        accumulate(False)
    else:
        # Ragged last L tile: lane mask gated to that tile only (out of hot loop).
        is_tail = l == n_l - 1
        pl.when(jnp.logical_not(is_tail))(lambda: accumulate(False))
        pl.when(is_tail)(lambda: accumulate(True))


# ---------------------------------------------------------------------------
# Pass 2: out = (W x) * scale + shift with BN (+ conv bias) folded into a
# per-channel f32 affine epilogue.  Fully independent tiles.
# ---------------------------------------------------------------------------
def _proj_kernel(x_ref, w_ref, scale_ref, shift_ref, o_ref, *, TN):
    w = w_ref[...]
    sc = scale_ref[...]
    sh = shift_ref[...]
    for i in range(TN):                           # static unroll, TN <= 8
        y = jnp.dot(w, x_ref[i], preferred_element_type=jnp.float32)
        o_ref[i] = (y * sc + sh).astype(o_ref.dtype)


# ---------------------------------------------------------------------------
# Fused single-pass kernel: used when the whole (x, out, W) working set fits the
# VMEM budget.  x is read from HBM exactly once; stats + projection in one call.
# ---------------------------------------------------------------------------
def _fused_kernel(x_ref, w_ref, b_ref, gamma_ref, beta_ref, o_ref, *, eps):
    n_batch = x_ref.shape[0]
    seq = x_ref.shape[2]
    m = n_batch * seq
    w = w_ref[...]
    b = b_ref[...]
    cout = w.shape[0]

    def stats_body(n, carry):
        s, q = carry
        y = jnp.dot(w, x_ref[n], preferred_element_type=jnp.float32) + b
        return (s + jnp.sum(y, axis=-1, keepdims=True),
                q + jnp.sum(y * y, axis=-1, keepdims=True))

    zeros = jnp.zeros((cout, 1), jnp.float32)
    s, q = jax.lax.fori_loop(0, n_batch, stats_body, (zeros, zeros))
    mean = s * (1.0 / m)
    var = jnp.maximum(q * (1.0 / m) - mean * mean, 0.0)
    scale = gamma_ref[...] * jax.lax.rsqrt(var + eps)
    shift = (b - mean) * scale + beta_ref[...]

    def proj_body(n, carry):
        y = jnp.dot(w, x_ref[n], preferred_element_type=jnp.float32)
        o_ref[n] = (y * scale + shift).astype(o_ref.dtype)
        return carry

    jax.lax.fori_loop(0, n_batch, proj_body, 0)


# ---------------------------------------------------------------------------
# Wrapper
# ---------------------------------------------------------------------------
def conv1x1_bn_train(x, weight, bias, gamma, beta, *, eps=1e-5,
                     force_two_pass=False, max_cols=None):
    """x: (N, Cin, L); weight: (Cout, Cin); bias/gamma/beta: (Cout,).
    Returns training-mode BatchNorm1d(Conv1d_k1(x)) of shape (N, Cout, L)."""
    N, Cin, L = x.shape
    Cout = weight.shape[0]
    isz = jnp.dtype(x.dtype).itemsize

    vmem_limit = _vmem_limit_bytes()
    budget = max(vmem_limit - (6 << 20), 8 << 20)

    w_in = weight.astype(x.dtype)
    b2 = bias.astype(jnp.float32).reshape(Cout, 1)

    # ---- fused single-pass path (x read from HBM exactly once) -------------
    fused_bytes = (N * Cin * L + N * Cout * L) * isz + 2 * Cout * Cin * isz + 16 * Cout * 4
    if (not force_two_pass) and fused_bytes <= budget // 2:
        g2 = gamma.astype(jnp.float32).reshape(Cout, 1)
        t2 = beta.astype(jnp.float32).reshape(Cout, 1)
        return pl.pallas_call(
            functools.partial(_fused_kernel, eps=eps),
            out_shape=jax.ShapeDtypeStruct((N, Cout, L), x.dtype),
            compiler_params=pltpu.CompilerParams(vmem_limit_bytes=vmem_limit),
        )(x, w_in, b2, g2, t2)

    # ---- two-pass tiled path ------------------------------------------------
    TN, TL = _choose_tiles(N, Cin, Cout, L, isz, budget, max_cols=max_cols)
    n_n = N // TN
    n_l = pl.cdiv(L, TL)

    x_spec = pl.BlockSpec((TN, Cin, TL), lambda n, l: (n, 0, l))
    w_spec = pl.BlockSpec((Cout, Cin), lambda n, l: (0, 0))      # grid-invariant
    v_spec = pl.BlockSpec((Cout, 1), lambda n, l: (0, 0))        # grid-invariant vectors
    acc_spec = pl.BlockSpec((1, Cout, 1), lambda n, l: (n, 0, 0))  # per-N-shard partials

    # pass 1: batch statistics (N axis parallel -> both v7x TCs participate)
    sum_y, sq_y = pl.pallas_call(
        functools.partial(_stats_kernel, L=L, TL=TL, n_l=n_l, TN=TN),
        out_shape=(jax.ShapeDtypeStruct((n_n, Cout, 1), jnp.float32),
                   jax.ShapeDtypeStruct((n_n, Cout, 1), jnp.float32)),
        grid=(n_n, n_l),
        in_specs=[x_spec, w_spec, v_spec],
        out_specs=(acc_spec, acc_spec),
        compiler_params=pltpu.CompilerParams(
            dimension_semantics=("parallel", "arbitrary"),
            vmem_limit_bytes=vmem_limit),
    )(x, w_in, b2)

    # fold: training-mode BN (biased variance) + conv bias -> per-channel affine
    m = float(N * L)
    s = jnp.sum(sum_y, axis=0)[:, 0]
    q = jnp.sum(sq_y, axis=0)[:, 0]
    mean = s / m
    var = jnp.maximum(q / m - mean * mean, 0.0)
    scale = gamma.astype(jnp.float32) * jax.lax.rsqrt(var + eps)
    shift = (bias.astype(jnp.float32) - mean) * scale + beta.astype(jnp.float32)
    scale2 = scale.reshape(Cout, 1)
    shift2 = shift.reshape(Cout, 1)

    # pass 2: projection + f32 affine epilogue, fully parallel tiles
    out = pl.pallas_call(
        functools.partial(_proj_kernel, TN=TN),
        out_shape=jax.ShapeDtypeStruct((N, Cout, L), x.dtype),
        grid=(n_n, n_l),
        in_specs=[x_spec, w_spec, v_spec, v_spec],
        out_specs=pl.BlockSpec((TN, Cout, TL), lambda n, l: (n, 0, l)),
        compiler_params=pltpu.CompilerParams(
            dimension_semantics=("parallel", "parallel"),
            vmem_limit_bytes=vmem_limit),
    )(x, w_in, scale2, shift2)
    return out


class AddResidualPallas:
    """JAX/Pallas equivalent of addResidual (forward, training-mode BN)."""

    def __init__(self, in_feats, out_feats, kernel_size=1, residual=True, key=None):
        self.in_feats = in_feats
        self.out_feats = out_feats
        self.residual = residual
        self.needs_proj = residual and (in_feats != out_feats)

        if self.needs_proj:
            if key is None:
                key = jax.random.PRNGKey(0)
            # conv_init: kaiming_normal_(weight, mode='fan_out'); bias = 0.
            fan_out = out_feats * kernel_size
            std = (2.0 / fan_out) ** 0.5
            w = jax.random.normal(key, (out_feats, in_feats, kernel_size),
                                  dtype=jnp.float32) * std
            self.weight = w[:, :, 0]                             # (Cout, Cin)
            self.bias = jnp.zeros((out_feats,), jnp.float32)
            # bn_init(bn, 1): gamma = 1, beta = 0.
            self.gamma = jnp.ones((out_feats,), jnp.float32)
            self.beta = jnp.zeros((out_feats,), jnp.float32)
            # TODO(synk): kernel_size > 1 (true convolution) not implemented; the
            # module is only ever used with kernel_size=1.
            # TODO(synk): BN running_mean/running_var not tracked; only the
            # training-mode forward (batch statistics) is implemented.

    def __call__(self, x):
        # x: (N, C_in, L) -- NCL, matching PyTorch Conv1d input.
        if not self.residual:
            return jnp.zeros((), x.dtype)   # matches `lambda x: 0` (scalar zero)
        if not self.needs_proj:
            return x
        return conv1x1_bn_train(x, self.weight, self.bias, self.gamma, self.beta,
                                eps=1e-5)


def _reference(x, weight, bias, gamma, beta, eps=1e-5):
    y = jnp.einsum("oc,ncl->nol", weight, x) + bias[None, :, None]
    mean = jnp.mean(y, axis=(0, 2), keepdims=True)
    var = jnp.mean((y - mean) ** 2, axis=(0, 2), keepdims=True)
    return ((y - mean) * jax.lax.rsqrt(var + eps)
            * gamma[None, :, None] + beta[None, :, None])


if __name__ == "__main__":
    key = jax.random.PRNGKey(0)
    k_x, k_w, k_x2, k_w2, k_b2, k_g2, k_t2 = jax.random.split(key, 7)

    # --- module path (small shape -> fused single-pass kernel) --------------
    N, Cin, Cout, L = 2, 4, 8, 16
    x = jax.random.normal(k_x, (N, Cin, L), dtype=jnp.float32)
    mod = AddResidualPallas(Cin, Cout, kernel_size=1, residual=True, key=k_w)
    out = jax.block_until_ready(mod(x))
    ref = _reference(x, mod.weight, mod.bias, mod.gamma, mod.beta)
    assert out.shape == (N, Cout, L)
    assert jnp.max(jnp.abs(out - ref)) < 5e-4

    # --- forced two-pass tiled path on the same inputs (exercises TN > 1) ---
    out2 = jax.block_until_ready(conv1x1_bn_train(
        x, mod.weight, mod.bias, mod.gamma, mod.beta, force_two_pass=True))
    assert jnp.max(jnp.abs(out2 - ref)) < 5e-4

    # --- two-pass path with multiple L tiles and a ragged tail (TL=128) -----
    N2, Cin2, Cout2, L2 = 2, 8, 16, 160
    x2 = jax.random.normal(k_x2, (N2, Cin2, L2), dtype=jnp.float32)
    w2 = jax.random.normal(k_w2, (Cout2, Cin2), dtype=jnp.float32) * (2.0 / Cout2) ** 0.5
    bb2 = 0.1 * jax.random.normal(k_b2, (Cout2,), dtype=jnp.float32)
    gg2 = 1.0 + 0.1 * jax.random.normal(k_g2, (Cout2,), dtype=jnp.float32)
    tt2 = 0.1 * jax.random.normal(k_t2, (Cout2,), dtype=jnp.float32)
    out3 = jax.block_until_ready(conv1x1_bn_train(
        x2, w2, bb2, gg2, tt2, force_two_pass=True, max_cols=128))
    ref3 = _reference(x2, w2, bb2, gg2, tt2)
    assert out3.shape == (N2, Cout2, L2)
    assert jnp.max(jnp.abs(out3 - ref3)) < 1e-3

    # --- glue paths (no kernel involved) -------------------------------------
    ident = AddResidualPallas(Cin, Cin, residual=True)
    assert jnp.array_equal(ident(x), x)
    none = AddResidualPallas(Cin, Cout, residual=False)
    assert none(x).shape == ()

    print("KERNEL_OK")
</pallas_src>

<mosaic_0001>
module attributes {stable_mosaic.version = 11 : i64} {
  func.func @_fused_kernel(%arg0: memref<2x4x16xf32, #tpu.memory_space<vmem>>, %arg1: memref<8x4xf32, #tpu.memory_space<vmem>>, %arg2: memref<8x1xf32, #tpu.memory_space<vmem>>, %arg3: memref<8x1xf32, #tpu.memory_space<vmem>>, %arg4: memref<8x1xf32, #tpu.memory_space<vmem>>, %arg5: memref<2x8x16xf32, #tpu.memory_space<vmem>>) attributes {dimension_semantics = [], scalar_prefetch = 0 : i64, scratch_operands = 0 : i64, tpu.core_type = #tpu.core_type<tc>} {
    %c0 = arith.constant 0 : index
    %c0_0 = arith.constant 0 : index
    %0 = vector.load %arg1[%c0, %c0_0] : memref<8x4xf32, #tpu.memory_space<vmem>>, vector<8x4xf32>
    %c0_1 = arith.constant 0 : index
    %c0_2 = arith.constant 0 : index
    %1 = vector.load %arg2[%c0_1, %c0_2] : memref<8x1xf32, #tpu.memory_space<vmem>>, vector<8x1xf32>
    %cst = arith.constant 0.000000e+00 : f32
    %2 = vector.broadcast %cst : f32 to vector<8x1xf32>
    %c0_i32 = arith.constant 0 : i32
    %c2_i32 = arith.constant 2 : i32
    %3 = arith.addi %c0_i32, %c2_i32 : i32
    %c1_i32 = arith.constant 1 : i32
    %4:2 = scf.for %arg6 = %c0_i32 to %3 step %c1_i32 iter_args(%arg7 = %2, %arg8 = %2) -> (vector<8x1xf32>, vector<8x1xf32>)  : i32 {
      %23 = arith.index_cast %arg6 : i32 to index
      %c0_16 = arith.constant 0 : index
      %c0_17 = arith.constant 0 : index
      %24 = vector.load %arg0[%23, %c0_16, %c0_17] : memref<2x4x16xf32, #tpu.memory_space<vmem>>, vector<1x4x16xf32>
      %25 = vector.shape_cast %24 : vector<1x4x16xf32> to vector<4x16xf32>
      %cst_18 = arith.constant dense<0.000000e+00> : vector<8x16xf32>
      %26 = tpu.matmul %0, %25, %cst_18 {dimension_numbers = #tpu.dot_dimension_numbers<[1], [0], [0], [1], [0, 0, 1, 1], [], []>} : vector<8x4xf32>, vector<4x16xf32>, vector<8x16xf32> -> vector<8x16xf32>
      %27 = vector.broadcast %1 : vector<8x1xf32> to vector<8x16xf32>
      %28 = arith.addf %26, %27 : vector<8x16xf32>
      %cst_19 = arith.constant dense<0.000000e+00> : vector<8xf32>
      %29 = vector.multi_reduction <add>, %28, %cst_19 [1] : vector<8x16xf32> to vector<8xf32>
      %30 = vector.shape_cast %29 : vector<8xf32> to vector<8x1xf32>
      %31 = arith.addf %arg7, %30 : vector<8x1xf32>
      %32 = arith.mulf %28, %28 : vector<8x16xf32>
      %cst_20 = arith.constant dense<0.000000e+00> : vector<8xf32>
      %33 = vector.multi_reduction <add>, %32, %cst_20 [1] : vector<8x16xf32> to vector<8xf32>
      %34 = vector.shape_cast %33 : vector<8xf32> to vector<8x1xf32>
      %35 = arith.addf %arg8, %34 : vector<8x1xf32>
      scf.yield %31, %35 : vector<8x1xf32>, vector<8x1xf32>
    }
    %c2_i32_3 = arith.constant 2 : i32
    %cst_4 = arith.constant 3.125000e-02 : f32
    %5 = vector.broadcast %cst_4 : f32 to vector<8x1xf32>
    %6 = arith.mulf %4#0, %5 : vector<8x1xf32>
    %cst_5 = arith.constant 3.125000e-02 : f32
    %7 = vector.broadcast %cst_5 : f32 to vector<8x1xf32>
    %8 = arith.mulf %4#1, %7 : vector<8x1xf32>
    %9 = arith.mulf %6, %6 : vector<8x1xf32>
    %10 = arith.subf %8, %9 : vector<8x1xf32>
    %cst_6 = arith.constant 0.000000e+00 : f32
    %11 = vector.broadcast %cst_6 : f32 to vector<8x1xf32>
    %12 = arith.maximumf %10, %11 : vector<8x1xf32>
    %c0_7 = arith.constant 0 : index
    %c0_8 = arith.constant 0 : index
    %13 = vector.load %arg3[%c0_7, %c0_8] : memref<8x1xf32, #tpu.memory_space<vmem>>, vector<8x1xf32>
    %cst_9 = arith.constant 9.99999974E-6 : f32
    %14 = vector.broadcast %cst_9 : f32 to vector<8x1xf32>
    %15 = arith.addf %12, %14 : vector<8x1xf32>
    %16 = math.rsqrt %15 : vector<8x1xf32>
    %17 = arith.mulf %13, %16 : vector<8x1xf32>
    %18 = arith.subf %1, %6 : vector<8x1xf32>
    %19 = arith.mulf %18, %17 : vector<8x1xf32>
    %c0_10 = arith.constant 0 : index
    %c0_11 = arith.constant 0 : index
    %20 = vector.load %arg4[%c0_10, %c0_11] : memref<8x1xf32, #tpu.memory_space<vmem>>, vector<8x1xf32>
    %21 = arith.addf %19, %20 : vector<8x1xf32>
    %c0_i32_12 = arith.constant 0 : i32
    %c2_i32_13 = arith.constant 2 : i32
    %22 = arith.addi %c0_i32_12, %c2_i32_13 : i32
    %c1_i32_14 = arith.constant 1 : i32
    scf.for %arg6 = %c0_i32_12 to %22 step %c1_i32_14  : i32 {
      %23 = arith.index_cast %arg6 : i32 to index
      %c0_16 = arith.constant 0 : index
      %c0_17 = arith.constant 0 : index
      %24 = vector.load %arg0[%23, %c0_16, %c0_17] : memref<2x4x16xf32, #tpu.memory_space<vmem>>, vector<1x4x16xf32>
      %25 = vector.shape_cast %24 : vector<1x4x16xf32> to vector<4x16xf32>
      %cst_18 = arith.constant dense<0.000000e+00> : vector<8x16xf32>
      %26 = tpu.matmul %0, %25, %cst_18 {dimension_numbers = #tpu.dot_dimension_numbers<[1], [0], [0], [1], [0, 0, 1, 1], [], []>} : vector<8x4xf32>, vector<4x16xf32>, vector<8x16xf32> -> vector<8x16xf32>
      %27 = vector.broadcast %17 : vector<8x1xf32> to vector<8x16xf32>
      %28 = arith.mulf %26, %27 : vector<8x16xf32>
      %29 = vector.broadcast %21 : vector<8x1xf32> to vector<8x16xf32>
      %30 = arith.addf %28, %29 : vector<8x16xf32>
      %31 = arith.index_cast %arg6 : i32 to index
      %c0_19 = arith.constant 0 : index
      %c0_20 = arith.constant 0 : index
      %32 = vector.load %arg5[%31, %c0_19, %c0_20] : memref<2x8x16xf32, #tpu.memory_space<vmem>>, vector<1x8x16xf32>
      %33 = vector.shape_cast %32 : vector<1x8x16xf32> to vector<8x16xf32>
      %34 = vector.shape_cast %30 : vector<8x16xf32> to vector<1x8x16xf32>
      tpu.vector_store %arg5[%31, %c0_19, %c0_20], %34 {strides = array<i32>} : memref<2x8x16xf32, #tpu.memory_space<vmem>>, vector<1x8x16xf32>,
    }
    %c2_i32_15 = arith.constant 2 : i32
    return
  }
}

</mosaic_0001>

<llo_original>
// kernel: tpu_custom_call.1
$region0: #{tpu_custom_call.1}
  #allocation0 [shape = 'u32[]', space=smem, size = 0x4, offset = 0x4, fixed_abs, tag = 'smem constant byte address 0x4 - core index']
  #allocation1 [shape = 'u32[144,128]{1,0:T(1,128)}', space=vmem, size = 0x12000, scoped, tag = 'internal scratch']
  %s0 = inlined_call_operand.vmem [shape: f32[2,4,16], index: 0, kind: input, shape index: {}]
  %s1 = inlined_call_operand.vmem [shape: f32[8,4], index: 1, kind: input, shape index: {}]
  %s2 = inlined_call_operand.vmem [shape: f32[8,1], index: 2, kind: input, shape index: {}]
  %s3 = inlined_call_operand.vmem [shape: f32[8,1], index: 3, kind: input, shape index: {}]
  %s4 = inlined_call_operand.vmem [shape: f32[8,1], index: 4, kind: input, shape index: {}]
  %s5 = inlined_call_operand.hbm [shape: f32[2,8,16], index: 5, kind: output, shape index: {}]
  %s6 = sld [smem:[#allocation0]]
  $region44: #{tpu_custom_call.1} parent=0
    _
  %s8 = ssub.s32 1, %s6
  %s9 = scalar_select 0, %s8, %s6
  $region1: #{tpu_custom_call.1} parent=0
    #allocation2 [shape = 'u8[8192]{0}', space=vmem, size = 0x2000, scoped, tag = 'output window, operand 0, single buffered']
    #allocation3 [shape = 's32[1]{0}', space=sflag, size = 0x4, scoped, tag = 'scoped memory for tpu_custom_call.1']
    %10 = vsyncpa [#allocation3], 0
    // Predicated region
    $region2: #{tpu_custom_call.1} parent=1 // pred_check
      _
    $region3: #{tpu_custom_call.1} parent=1 // pred_check_branch
      %12 = sbr.rel (0) target = $region5
    $region4: #{tpu_custom_call.1} parent=1 // pred_region
      _
    $region5: #{tpu_custom_call.1} parent=1 // pred_fallthru
      _
    // Predicated region
    $region6: #{tpu_custom_call.1} parent=1 // pred_check
      _
    $region7: #{tpu_custom_call.1} parent=1 // pred_check_branch
      %14 = sbr.rel (0) target = $region9
    $region8: #{tpu_custom_call.1} parent=1 // pred_region
      _
    $region9: #{tpu_custom_call.1} parent=1 // pred_fallthru
      _
    // Predicated region
    $region10: #{tpu_custom_call.1} parent=1 // pred_check
      _
    $region11: #{tpu_custom_call.1} parent=1 // pred_check_branch
      %16 = sbr.rel (0) target = $region13
    $region12: #{tpu_custom_call.1} parent=1 // pred_region
      _
    $region13: #{tpu_custom_call.1} parent=1 // pred_fallthru
      _
    // Predicated region
    $region14: #{tpu_custom_call.1} parent=1 // pred_check
      _
    $region15: #{tpu_custom_call.1} parent=1 // pred_check_branch
      %18 = sbr.rel (0) target = $region17
    $region16: #{tpu_custom_call.1} parent=1 // pred_region
      _
    $region17: #{tpu_custom_call.1} parent=1 // pred_fallthru
      _
    // Predicated region
    $region18: #{tpu_custom_call.1} parent=1 // pred_check
      _
    $region19: #{tpu_custom_call.1} parent=1 // pred_check_branch
      %20 = sbr.rel (0) target = $region21
    $region20: #{tpu_custom_call.1} parent=1 // pred_region
      _
    $region21: #{tpu_custom_call.1} parent=1 // pred_fallthru
      _
    %v21 = vld [vmem:[%s1] sm:$0xff]
    %v22 = vld [vmem:[%s2] sm:$0xff]
    loop: start=0, step=1, limit=2
    $region22: #{tpu_custom_call.1} parent=1 // loop_pre_header
      _
    $region23: #{tpu_custom_call.1} parent=1 // loop_header
      %s24 = sphi 0, %s28
      %p25 = scmp.ge.s32.totalorder %s24, 2
      %v29 = vphi 0.0, %v121
      %v30 = vphi 0.0, %v126
    $region24: #{tpu_custom_call.1} parent=1 // loop_header_branch
      %27 = sbr.rel (%p25) target = $region28
    $region25: #{tpu_custom_call.1} parent=1 // loop_body
      %s31 = smul.u32 %s24, 4
      %s32 = scalar_lea.vmem %s0, %s31
      %v33 = vld [vmem:[%s32] sm:$0xf]
      %35 = vset.pattern.permute.xlu0 0
      %36 = vperm.xlu0 %35, %v22
      %v37 = vpop.permute.xlu0 %36
      %vm39 = vcmask 31744
      %v41 = vsel %vm39, %v21, 0
      %vm43 = vcmask 1043456
      %v45 = vsel %vm43, %v33, 0
      %47 = vmatprep.subr.mxu0 0.0
      %48 = vmatpush1.msra.mxu0 %v45
      %49 = vmatprep.subr.mxu0 0.0
      %50 = vmatpush1.msra.mxu0 0.0
      %51 = vmatprep.subr.mxu0 0.0
      %52 = vmatpush1.msra.mxu0 0.0
      %53 = vmatprep.subr.mxu0 0.0
      %54 = vmatpush1.msra.mxu0 0.0
      %55 = vmatprep.subr.mxu0 0.0
      %56 = vmatpush1.msra.mxu0 0.0
      %57 = vmatprep.subr.mxu0 0.0
      %58 = vmatpush1.msra.mxu0 0.0
      %59 = vmatprep.subr.mxu0 0.0
      %60 = vmatpush1.msra.mxu0 0.0
      %61 = vmatprep.subr.mxu0 0.0
      %62 = vmatpush1.msra.mxu0 0.0
      %63 = vmatprep.subr.mxu0 0.0
      %64 = vmatpush1.msra.mxu0 0.0
      %65 = vmatprep.subr.mxu0 0.0
      %66 = vmatpush1.msra.mxu0 0.0
      %67 = vmatprep.subr.mxu0 0.0
      %68 = vmatpush1.msra.mxu0 0.0
      %69 = vmatprep.subr.mxu0 0.0
      %70 = vmatpush1.msra.mxu0 0.0
      %71 = vmatprep.subr.mxu0 0.0
      %72 = vmatpush1.msra.mxu0 0.0
      %73 = vmatprep.subr.mxu0 0.0
      %74 = vmatpush1.msra.mxu0 0.0
      %75 = vmatprep.subr.mxu0 0.0
      %76 = vmatpush1.msra.mxu0 0.0
      %77 = vmatprep.subr.mxu0 0.0
      %78 = vmatpush1.msra.mxu0 0.0
      %79 = vmatprep.subr.mxu0 0.0
      %80 = vmatpush1.msra.mxu0 0.0
      %81 = vmatprep.subr.mxu0 0.0
      %82 = vmatpush1.msra.mxu0 0.0
      %83 = vmatprep.subr.mxu0 0.0
      %84 = vmatpush1.msra.mxu0 0.0
      %85 = vmatprep.subr.mxu0 0.0
      %86 = vmatpush1.msra.mxu0 0.0
      %87 = vmatprep.subr.mxu0 0.0
      %88 = vmatpush1.msra.mxu0 0.0
      %89 = vmatprep.subr.mxu0 0.0
      %90 = vmatpush1.msra.mxu0 0.0
      %91 = vmatprep.subr.mxu0 0.0
      %92 = vmatpush1.msra.mxu0 0.0
      %93 = vmatprep.subr.mxu0 0.0
      %94 = vmatpush1.msra.mxu0 0.0
      %95 = vmatprep.subr.mxu0 0.0
      %96 = vmatpush1.msra.mxu0 0.0
      %97 = vmatprep.subr.mxu0 0.0
      %98 = vmatpush1.msra.mxu0 0.0
      %99 = vmatprep.subr.mxu0 0.0
      %100 = vmatpush1.msra.mxu0 0.0
      %101 = vmatprep.subr.mxu0 0.0
      %102 = vmatpush1.msra.mxu0 0.0
      %103 = vmatprep.subr.mxu0 0.0
      %104 = vmatpush1.msra.mxu0 0.0
      %105 = vmatprep.subr.mxu0 0.0
      %106 = vmatpush1.msra.mxu0 0.0
      %107 = vmatprep.subr.mxu0 0.0
      %108 = vmatpush1.msra.mxu0 0.0
      %109 = vmatprep.subr.mxu0 0.0
      %110 = vmatpush1.msra.mxu0 0.0
      %111 = vmatprep.mubr.f32.mxu0 0.0
      %112 = vmatmul.mubr.f32.gmra.mrb[0].mxu0 %v41
      %v113 = vpop.f32.mrb[0].mxu0
      %v114 = vadd.f32 %v37, %v113
      %v115 = vpop.f32.mrb[0].mxu0
      %116 = vdwg.mxu0
      %vm117 = vcmask 130048
      %v118 = vsel %vm117, %v114, 0.0
      %119 = vadd.xlane.f32.xlu0 %v118
      %v120 = vpop.xlane.xlu0 %119
      %v121 = vadd.f32 %v29, %v120
      %v122 = vmul.f32 %v114, %v114
      %v123 = vsel %vm117, %v122, 0.0
      %124 = vadd.xlane.f32.xlu0 %v123
      %v125 = vpop.xlane.xlu0 %124
      %v126 = vadd.f32 %v30, %v125
    $region26: #{tpu_custom_call.1} parent=1 // loop_footer
      %s28 = sadd.s32 1, %s24
    $region27: #{tpu_custom_call.1} parent=1 // loop_footer_branch
      %23 = sbr.rel target = $region23
    $region28: #{tpu_custom_call.1} parent=1 // loop_exit
      _
    %v127 = vmul.f32 %v29, 0.03125
    %v128 = vmul.f32 %v30, 0.03125
    %v129 = vmul.f32 %v127, %v127
    %v130 = vsub.f32 %v128, %v129
    %v131 = vmax.f32 %v130, 0.0
    %v132 = vld [vmem:[%s3] sm:$0xff]
    %v133 = vadd.f32 %v131, 1e-05
    %v134 = vrsqrt.pop %v133
    %v135 = vmul.f32 %v132, %v134
    %v136 = vsub.f32 %v22, %v127
    %v137 = vmul.f32 %v136, %v135
    %v138 = vld [vmem:[%s4] sm:$0xff]
    %v139 = vadd.f32 %v137, %v138
    loop: start=0, step=1, limit=2
    $region29: #{tpu_custom_call.1} parent=1 // loop_pre_header
      _
    $region30: #{tpu_custom_call.1} parent=1 // loop_header
      %s141 = sphi 0, %s145
      %p142 = scmp.ge.s32.totalorder %s141, 2
    $region31: #{tpu_custom_call.1} parent=1 // loop_header_branch
      %144 = sbr.rel (%p142) target = $region35
    $region32: #{tpu_custom_call.1} parent=1 // loop_body
      %s146 = smul.u32 %s141, 4
      %s147 = scalar_lea.vmem %s0, %s146
      %v148 = vld [vmem:[%s147] sm:$0xf]
      %vm149 = vcmask 31744
      %v151 = vsel %vm149, %v21, 0
      %vm153 = vcmask 1043456
      %v155 = vsel %vm153, %v148, 0
      %157 = vmatprep.subr.mxu0 0.0
      %158 = vmatpush1.msra.mxu0 %v155
      %159 = vmatprep.subr.mxu0 0.0
      %160 = vmatpush1.msra.mxu0 0.0
      %161 = vmatprep.subr.mxu0 0.0
      %162 = vmatpush1.msra.mxu0 0.0
      %163 = vmatprep.subr.mxu0 0.0
      %164 = vmatpush1.msra.mxu0 0.0
      %165 = vmatprep.subr.mxu0 0.0
      %166 = vmatpush1.msra.mxu0 0.0
      %167 = vmatprep.subr.mxu0 0.0
      %168 = vmatpush1.msra.mxu0 0.0
      %169 = vmatprep.subr.mxu0 0.0
      %170 = vmatpush1.msra.mxu0 0.0
      %171 = vmatprep.subr.mxu0 0.0
      %172 = vmatpush1.msra.mxu0 0.0
      %173 = vmatprep.subr.mxu0 0.0
      %174 = vmatpush1.msra.mxu0 0.0
      %175 = vmatprep.subr.mxu0 0.0
      %176 = vmatpush1.msra.mxu0 0.0
      %177 = vmatprep.subr.mxu0 0.0
      %178 = vmatpush1.msra.mxu0 0.0
      %179 = vmatprep.subr.mxu0 0.0
      %180 = vmatpush1.msra.mxu0 0.0
      %181 = vmatprep.subr.mxu0 0.0
      %182 = vmatpush1.msra.mxu0 0.0
      %183 = vmatprep.subr.mxu0 0.0
      %184 = vmatpush1.msra.mxu0 0.0
      %185 = vmatprep.subr.mxu0 0.0
      %186 = vmatpush1.msra.mxu0 0.0
      %187 = vmatprep.subr.mxu0 0.0
      %188 = vmatpush1.msra.mxu0 0.0
      %189 = vmatprep.subr.mxu0 0.0
      %190 = vmatpush1.msra.mxu0 0.0
      %191 = vmatprep.subr.mxu0 0.0
      %192 = vmatpush1.msra.mxu0 0.0
      %193 = vmatprep.subr.mxu0 0.0
      %194 = vmatpush1.msra.mxu0 0.0
      %195 = vmatprep.subr.mxu0 0.0
      %196 = vmatpush1.msra.mxu0 0.0
      %197 = vmatprep.subr.mxu0 0.0
      %198 = vmatpush1.msra.mxu0 0.0
      %199 = vmatprep.subr.mxu0 0.0
      %200 = vmatpush1.msra.mxu0 0.0
      %201 = vmatprep.subr.mxu0 0.0
      %202 = vmatpush1.msra.mxu0 0.0
      %203 = vmatprep.subr.mxu0 0.0
      %204 = vmatpush1.msra.mxu0 0.0
      %205 = vmatprep.subr.mxu0 0.0
      %206 = vmatpush1.msra.mxu0 0.0
      %207 = vmatprep.subr.mxu0 0.0
      %208 = vmatpush1.msra.mxu0 0.0
      %209 = vmatprep.subr.mxu0 0.0
      %210 = vmatpush1.msra.mxu0 0.0
      %211 = vmatprep.subr.mxu0 0.0
      %212 = vmatpush1.msra.mxu0 0.0
      %213 = vmatprep.subr.mxu0 0.0
      %214 = vmatpush1.msra.mxu0 0.0
      %215 = vmatprep.subr.mxu0 0.0
      %216 = vmatpush1.msra.mxu0 0.0
      %217 = vmatprep.subr.mxu0 0.0
      %218 = vmatpush1.msra.mxu0 0.0
      %219 = vmatprep.subr.mxu0 0.0
      %220 = vmatpush1.msra.mxu0 0.0
      %221 = vmatprep.mubr.f32.mxu0 0.0
      %222 = vmatmul.mubr.f32.gmra.mrb[0].mxu0 %v151
      %v223 = vpop.f32.mrb[0].mxu0
      %v224 = vadd.f32 0.0, %v223
      %v225 = vpop.f32.mrb[0].mxu0
      %226 = vdwg.mxu0
      %228 = vset.pattern.permute.xlu0 0
      %229 = vperm.xlu0 %228, %v135
      %v230 = vpop.permute.xlu0 %229
      %v232 = vmul.f32 %v224, %v230
      %234 = vset.pattern.permute.xlu0 0
      %235 = vperm.xlu0 %234, %v139
      %v236 = vpop.permute.xlu0 %235
      %v238 = vadd.f32 %v232, %v236
      %s239 = smul.u32 %s141, 8
      %s240 = scalar_lea.vmem [#allocation2], %s239
      %vm241 = vcmask 130048
      %242 = vst.msk [vmem:[%s240] sm:$0xff] %vm241, %v238
    $region33: #{tpu_custom_call.1} parent=1 // loop_footer
      %s145 = sadd.s32 1, %s141
    $region34: #{tpu_custom_call.1} parent=1 // loop_footer_branch
      %140 = sbr.rel target = $region30
    $region35: #{tpu_custom_call.1} parent=1 // loop_exit
      _
    // Predicated region
    $region36: #{tpu_custom_call.1} parent=1 // pred_check
      _
    $region37: #{tpu_custom_call.1} parent=1 // pred_check_branch
      %244 = sbr.rel (0) target = $region39
    $region38: #{tpu_custom_call.1} parent=1 // pred_region
      %s246 = ssub.s32 256, 256
      %247 = vsyncadd [#allocation3], %s246
      %s248 = sshll.u32 [#allocation2], 4
      %s249 = int_to_ptr.vmem [resolvable:$true] %s248
      %254 = dma.vmem_to_hbm [thread:$0]  %s249, 256, %s5, [#allocation3], 128, 128, 8
    $region39: #{tpu_custom_call.1} parent=1 // pred_fallthru
      _
    // Predicated region
    $region40: #{tpu_custom_call.1} parent=1 // pred_check
      _
    $region41: #{tpu_custom_call.1} parent=1 // pred_check_branch
      %256 = sbr.rel (0) target = $region43
    $region42: #{tpu_custom_call.1} parent=1 // pred_region
      %257 = dma.done [#allocation3], 256
    $region43: #{tpu_custom_call.1} parent=1 // pred_fallthru
      _
    %258 = vsyncpa [#allocation3], 1

</llo_original>
